<compile_context>
chip_gen: v5e
topology: v5e:2x2
jax: 0.10.0
libtpu: 0.0.40
codegen_flags: <defaults>
</compile_context>

<pallas_src>
import functools

import jax
import jax.numpy as jnp
from jax.experimental import pallas as pl
from jax.experimental.pallas import tpu as pltpu


def _rnn_fused_kernel(x_ref, wih_t_ref, whh_t_ref, who_t_ref,
                      out_ref, hidden_ref, hs_scratch, *, T, B):
    """Fully fused RNN forward (recurrence + readout) in one kernel invocation.

    x_ref      : (T*B, I)  time-major flattened input, VMEM resident
    wih_t_ref  : (I, H)    W_ih^T
    whh_t_ref  : (H, H)    W_hh^T
    who_t_ref  : (H, O)    W_ho^T
    out_ref    : (B*T, O)  readout of every hidden state (batch-major flatten)
    hidden_ref : (1, B, H) final hidden state
    hs_scratch : (B*T, H)  batch-major hidden-state history (VMEM scratch)
    """
    H = whh_t_ref.shape[0]

    # Hoisted input projection: one MXU push covers all T steps.
    xproj = jnp.dot(x_ref[...], wih_t_ref[...],
                    preferred_element_type=jnp.float32)            # (T*B, H), time-major

    whh_t = whh_t_ref[...]                                         # loop-invariant load
    h = jnp.zeros((B, H), jnp.float32)                             # h_0 = 0

    # T is tiny and static -> full static unroll; only (dot -> add -> tanh) is serial.
    for t in range(T):
        h = jnp.tanh(xproj[t * B:(t + 1) * B, :] +
                     jnp.dot(h, whh_t, preferred_element_type=jnp.float32))
        # Scatter this step into the batch-major history (row b*T + t).  Static slices;
        # these stores are off the recurrence's critical dependency chain.
        for b in range(B):
            r = b * T + t
            hs_scratch[r:r + 1, :] = h[b:b + 1, :]

    # Final hidden state, written directly (no post-kernel slice).
    hidden_ref[0] = h                                              # (1, B, H)

    # Deferred readout fused into the epilogue: one MXU push + one store.
    out_ref[...] = jnp.dot(hs_scratch[...], who_t_ref[...],
                           preferred_element_type=jnp.float32)     # (B*T, O)


@jax.jit
def rnn_forward(x_btI, w_ih, w_hh, w_ho):
    """x_btI: (B, T, I) float32 (batch_first, like the PyTorch module).
       w_ih: (H, I), w_hh: (H, H), w_ho: (O, H)  -- PyTorch weight layouts.
       Returns (out, hidden): out (B*T, O), hidden (1, B, H)."""
    B, T, I = x_btI.shape
    H = w_hh.shape[0]
    O = w_ho.shape[0]

    # Tiny layout prep (fuses into one small XLA prologue under jit).
    x_flat = jnp.transpose(x_btI, (1, 0, 2)).reshape(T * B, I)     # time-major flatten
    wih_t = w_ih.T                                                 # (I, H)
    whh_t = w_hh.T                                                 # (H, H)
    who_t = w_ho.T                                                 # (H, O)

    vmem = pl.BlockSpec(memory_space=pltpu.MemorySpace.VMEM)       # whole array, resident

    out, hidden = pl.pallas_call(
        functools.partial(_rnn_fused_kernel, T=T, B=B),
        out_shape=(jax.ShapeDtypeStruct((B * T, O), jnp.float32),
                   jax.ShapeDtypeStruct((1, B, H), jnp.float32)),
        in_specs=[vmem, vmem, vmem, vmem],
        out_specs=(vmem, vmem),
        scratch_shapes=[pltpu.VMEM((B * T, H), jnp.float32)],
    )(x_flat, wih_t, whh_t, who_t)

    return out, hidden


def _reference(x_btI, w_ih, w_hh, w_ho):
    """Pure-JAX reference matching torch.nn.RNN semantics."""
    B, T, I = x_btI.shape
    H = w_hh.shape[0]

    def step(h, x_t):
        h_new = jnp.tanh(x_t @ w_ih.T + h @ w_hh.T)
        return h_new, h_new

    x_tbI = jnp.transpose(x_btI, (1, 0, 2))
    h0 = jnp.zeros((B, H), jnp.float32)
    hT, hs = jax.lax.scan(step, h0, x_tbI)                         # hs: (T, B, H)
    out = jnp.transpose(hs, (1, 0, 2)).reshape(B * T, H) @ w_ho.T
    return out, hT[None]


if __name__ == "__main__":
    # Small shapes consistent with the module's forward.
    B, T, I, H, O = 2, 8, 16, 32, 8

    key = jax.random.PRNGKey(0)
    kx, k1, k2, k3 = jax.random.split(key, 4)

    # Deterministic "PyTorch-like" init: uniform(-1/sqrt(H), 1/sqrt(H))
    bound = 1.0 / jnp.sqrt(jnp.float32(H))
    x = jax.random.normal(kx, (B, T, I), jnp.float32)
    w_ih = jax.random.uniform(k1, (H, I), jnp.float32, -bound, bound)
    w_hh = jax.random.uniform(k2, (H, H), jnp.float32, -bound, bound)
    w_ho = jax.random.uniform(k3, (O, H), jnp.float32, -bound, bound)

    out, hidden = jax.block_until_ready(rnn_forward(x, w_ih, w_hh, w_ho))

    out_ref, hidden_ref = _reference(x, w_ih, w_hh, w_ho)
    assert out.shape == (B * T, O) and hidden.shape == (1, B, H)
    assert jnp.allclose(out, out_ref, atol=1e-5, rtol=1e-5)
    assert jnp.allclose(hidden, hidden_ref, atol=1e-5, rtol=1e-5)

    print("KERNEL_OK")
</pallas_src>

<mosaic_0001>
module attributes {stable_mosaic.version = 11 : i64} {
  func.func @_rnn_fused_kernel(%arg0: memref<16x16xf32, #tpu.memory_space<vmem>>, %arg1: memref<16x32xf32, #tpu.memory_space<vmem>>, %arg2: memref<32x32xf32, #tpu.memory_space<vmem>>, %arg3: memref<32x8xf32, #tpu.memory_space<vmem>>, %arg4: memref<16x8xf32, #tpu.memory_space<vmem>>, %arg5: memref<1x2x32xf32, #tpu.memory_space<vmem>>, %arg6: memref<16x32xf32, #tpu.memory_space<vmem>>) attributes {dimension_semantics = [], scalar_prefetch = 0 : i64, scratch_operands = 1 : i64, tpu.core_type = #tpu.core_type<tc>} {
    %c0 = arith.constant 0 : index
    %c0_0 = arith.constant 0 : index
    %0 = vector.load %arg0[%c0, %c0_0] : memref<16x16xf32, #tpu.memory_space<vmem>>, vector<16x16xf32>
    %c0_1 = arith.constant 0 : index
    %c0_2 = arith.constant 0 : index
    %1 = vector.load %arg1[%c0_1, %c0_2] : memref<16x32xf32, #tpu.memory_space<vmem>>, vector<16x32xf32>
    %cst = arith.constant dense<0.000000e+00> : vector<16x32xf32>
    %2 = tpu.matmul %0, %1, %cst {dimension_numbers = #tpu.dot_dimension_numbers<[1], [0], [0], [1], [0, 0, 1, 1], [], []>} : vector<16x16xf32>, vector<16x32xf32>, vector<16x32xf32> -> vector<16x32xf32>
    %c0_3 = arith.constant 0 : index
    %c0_4 = arith.constant 0 : index
    %3 = vector.load %arg2[%c0_3, %c0_4] : memref<32x32xf32, #tpu.memory_space<vmem>>, vector<32x32xf32>
    %cst_5 = arith.constant 0.000000e+00 : f32
    %4 = vector.broadcast %cst_5 : f32 to vector<2x32xf32>
    %5 = vector.extract_strided_slice %2 {offsets = [0, 0], sizes = [2, 32], strides = [1, 1]} : vector<16x32xf32> to vector<2x32xf32>
    %cst_6 = arith.constant dense<0.000000e+00> : vector<2x32xf32>
    %6 = tpu.matmul %4, %3, %cst_6 {dimension_numbers = #tpu.dot_dimension_numbers<[1], [0], [0], [1], [0, 0, 1, 1], [], []>} : vector<2x32xf32>, vector<32x32xf32>, vector<2x32xf32> -> vector<2x32xf32>
    %7 = arith.addf %5, %6 : vector<2x32xf32>
    %8 = math.tanh %7 : vector<2x32xf32>
    %9 = vector.extract_strided_slice %8 {offsets = [0, 0], sizes = [1, 32], strides = [1, 1]} : vector<2x32xf32> to vector<1x32xf32>
    %c0_7 = arith.constant 0 : index
    %c0_8 = arith.constant 0 : index
    %10 = vector.load %arg6[%c0_7, %c0_8] : memref<16x32xf32, #tpu.memory_space<vmem>>, vector<1x32xf32>
    tpu.vector_store %arg6[%c0_7, %c0_8], %9 {strides = array<i32>} : memref<16x32xf32, #tpu.memory_space<vmem>>, vector<1x32xf32>,
    %11 = vector.extract_strided_slice %8 {offsets = [1, 0], sizes = [1, 32], strides = [1, 1]} : vector<2x32xf32> to vector<1x32xf32>
    %c8 = arith.constant 8 : index
    %c0_9 = arith.constant 0 : index
    %12 = vector.load %arg6[%c8, %c0_9] : memref<16x32xf32, #tpu.memory_space<vmem>>, vector<1x32xf32>
    tpu.vector_store %arg6[%c8, %c0_9], %11 {strides = array<i32>} : memref<16x32xf32, #tpu.memory_space<vmem>>, vector<1x32xf32>,
    %13 = vector.extract_strided_slice %2 {offsets = [2, 0], sizes = [2, 32], strides = [1, 1]} : vector<16x32xf32> to vector<2x32xf32>
    %cst_10 = arith.constant dense<0.000000e+00> : vector<2x32xf32>
    %14 = tpu.matmul %8, %3, %cst_10 {dimension_numbers = #tpu.dot_dimension_numbers<[1], [0], [0], [1], [0, 0, 1, 1], [], []>} : vector<2x32xf32>, vector<32x32xf32>, vector<2x32xf32> -> vector<2x32xf32>
    %15 = arith.addf %13, %14 : vector<2x32xf32>
    %16 = math.tanh %15 : vector<2x32xf32>
    %17 = vector.extract_strided_slice %16 {offsets = [0, 0], sizes = [1, 32], strides = [1, 1]} : vector<2x32xf32> to vector<1x32xf32>
    %c1 = arith.constant 1 : index
    %c0_11 = arith.constant 0 : index
    %18 = vector.load %arg6[%c1, %c0_11] : memref<16x32xf32, #tpu.memory_space<vmem>>, vector<1x32xf32>
    tpu.vector_store %arg6[%c1, %c0_11], %17 {strides = array<i32>} : memref<16x32xf32, #tpu.memory_space<vmem>>, vector<1x32xf32>,
    %19 = vector.extract_strided_slice %16 {offsets = [1, 0], sizes = [1, 32], strides = [1, 1]} : vector<2x32xf32> to vector<1x32xf32>
    %c9 = arith.constant 9 : index
    %c0_12 = arith.constant 0 : index
    %20 = vector.load %arg6[%c9, %c0_12] : memref<16x32xf32, #tpu.memory_space<vmem>>, vector<1x32xf32>
    tpu.vector_store %arg6[%c9, %c0_12], %19 {strides = array<i32>} : memref<16x32xf32, #tpu.memory_space<vmem>>, vector<1x32xf32>,
    %21 = vector.extract_strided_slice %2 {offsets = [4, 0], sizes = [2, 32], strides = [1, 1]} : vector<16x32xf32> to vector<2x32xf32>
    %cst_13 = arith.constant dense<0.000000e+00> : vector<2x32xf32>
    %22 = tpu.matmul %16, %3, %cst_13 {dimension_numbers = #tpu.dot_dimension_numbers<[1], [0], [0], [1], [0, 0, 1, 1], [], []>} : vector<2x32xf32>, vector<32x32xf32>, vector<2x32xf32> -> vector<2x32xf32>
    %23 = arith.addf %21, %22 : vector<2x32xf32>
    %24 = math.tanh %23 : vector<2x32xf32>
    %25 = vector.extract_strided_slice %24 {offsets = [0, 0], sizes = [1, 32], strides = [1, 1]} : vector<2x32xf32> to vector<1x32xf32>
    %c2 = arith.constant 2 : index
    %c0_14 = arith.constant 0 : index
    %26 = vector.load %arg6[%c2, %c0_14] : memref<16x32xf32, #tpu.memory_space<vmem>>, vector<1x32xf32>
    tpu.vector_store %arg6[%c2, %c0_14], %25 {strides = array<i32>} : memref<16x32xf32, #tpu.memory_space<vmem>>, vector<1x32xf32>,
    %27 = vector.extract_strided_slice %24 {offsets = [1, 0], sizes = [1, 32], strides = [1, 1]} : vector<2x32xf32> to vector<1x32xf32>
    %c10 = arith.constant 10 : index
    %c0_15 = arith.constant 0 : index
    %28 = vector.load %arg6[%c10, %c0_15] : memref<16x32xf32, #tpu.memory_space<vmem>>, vector<1x32xf32>
    tpu.vector_store %arg6[%c10, %c0_15], %27 {strides = array<i32>} : memref<16x32xf32, #tpu.memory_space<vmem>>, vector<1x32xf32>,
    %29 = vector.extract_strided_slice %2 {offsets = [6, 0], sizes = [2, 32], strides = [1, 1]} : vector<16x32xf32> to vector<2x32xf32>
    %cst_16 = arith.constant dense<0.000000e+00> : vector<2x32xf32>
    %30 = tpu.matmul %24, %3, %cst_16 {dimension_numbers = #tpu.dot_dimension_numbers<[1], [0], [0], [1], [0, 0, 1, 1], [], []>} : vector<2x32xf32>, vector<32x32xf32>, vector<2x32xf32> -> vector<2x32xf32>
    %31 = arith.addf %29, %30 : vector<2x32xf32>
    %32 = math.tanh %31 : vector<2x32xf32>
    %33 = vector.extract_strided_slice %32 {offsets = [0, 0], sizes = [1, 32], strides = [1, 1]} : vector<2x32xf32> to vector<1x32xf32>
    %c3 = arith.constant 3 : index
    %c0_17 = arith.constant 0 : index
    %34 = vector.load %arg6[%c3, %c0_17] : memref<16x32xf32, #tpu.memory_space<vmem>>, vector<1x32xf32>
    tpu.vector_store %arg6[%c3, %c0_17], %33 {strides = array<i32>} : memref<16x32xf32, #tpu.memory_space<vmem>>, vector<1x32xf32>,
    %35 = vector.extract_strided_slice %32 {offsets = [1, 0], sizes = [1, 32], strides = [1, 1]} : vector<2x32xf32> to vector<1x32xf32>
    %c11 = arith.constant 11 : index
    %c0_18 = arith.constant 0 : index
    %36 = vector.load %arg6[%c11, %c0_18] : memref<16x32xf32, #tpu.memory_space<vmem>>, vector<1x32xf32>
    tpu.vector_store %arg6[%c11, %c0_18], %35 {strides = array<i32>} : memref<16x32xf32, #tpu.memory_space<vmem>>, vector<1x32xf32>,
    %37 = vector.extract_strided_slice %2 {offsets = [8, 0], sizes = [2, 32], strides = [1, 1]} : vector<16x32xf32> to vector<2x32xf32>
    %cst_19 = arith.constant dense<0.000000e+00> : vector<2x32xf32>
    %38 = tpu.matmul %32, %3, %cst_19 {dimension_numbers = #tpu.dot_dimension_numbers<[1], [0], [0], [1], [0, 0, 1, 1], [], []>} : vector<2x32xf32>, vector<32x32xf32>, vector<2x32xf32> -> vector<2x32xf32>
    %39 = arith.addf %37, %38 : vector<2x32xf32>
    %40 = math.tanh %39 : vector<2x32xf32>
    %41 = vector.extract_strided_slice %40 {offsets = [0, 0], sizes = [1, 32], strides = [1, 1]} : vector<2x32xf32> to vector<1x32xf32>
    %c4 = arith.constant 4 : index
    %c0_20 = arith.constant 0 : index
    %42 = vector.load %arg6[%c4, %c0_20] : memref<16x32xf32, #tpu.memory_space<vmem>>, vector<1x32xf32>
    tpu.vector_store %arg6[%c4, %c0_20], %41 {strides = array<i32>} : memref<16x32xf32, #tpu.memory_space<vmem>>, vector<1x32xf32>,
    %43 = vector.extract_strided_slice %40 {offsets = [1, 0], sizes = [1, 32], strides = [1, 1]} : vector<2x32xf32> to vector<1x32xf32>
    %c12 = arith.constant 12 : index
    %c0_21 = arith.constant 0 : index
    %44 = vector.load %arg6[%c12, %c0_21] : memref<16x32xf32, #tpu.memory_space<vmem>>, vector<1x32xf32>
    tpu.vector_store %arg6[%c12, %c0_21], %43 {strides = array<i32>} : memref<16x32xf32, #tpu.memory_space<vmem>>, vector<1x32xf32>,
    %45 = vector.extract_strided_slice %2 {offsets = [10, 0], sizes = [2, 32], strides = [1, 1]} : vector<16x32xf32> to vector<2x32xf32>
    %cst_22 = arith.constant dense<0.000000e+00> : vector<2x32xf32>
    %46 = tpu.matmul %40, %3, %cst_22 {dimension_numbers = #tpu.dot_dimension_numbers<[1], [0], [0], [1], [0, 0, 1, 1], [], []>} : vector<2x32xf32>, vector<32x32xf32>, vector<2x32xf32> -> vector<2x32xf32>
    %47 = arith.addf %45, %46 : vector<2x32xf32>
    %48 = math.tanh %47 : vector<2x32xf32>
    %49 = vector.extract_strided_slice %48 {offsets = [0, 0], sizes = [1, 32], strides = [1, 1]} : vector<2x32xf32> to vector<1x32xf32>
    %c5 = arith.constant 5 : index
    %c0_23 = arith.constant 0 : index
    %50 = vector.load %arg6[%c5, %c0_23] : memref<16x32xf32, #tpu.memory_space<vmem>>, vector<1x32xf32>
    tpu.vector_store %arg6[%c5, %c0_23], %49 {strides = array<i32>} : memref<16x32xf32, #tpu.memory_space<vmem>>, vector<1x32xf32>,
    %51 = vector.extract_strided_slice %48 {offsets = [1, 0], sizes = [1, 32], strides = [1, 1]} : vector<2x32xf32> to vector<1x32xf32>
    %c13 = arith.constant 13 : index
    %c0_24 = arith.constant 0 : index
    %52 = vector.load %arg6[%c13, %c0_24] : memref<16x32xf32, #tpu.memory_space<vmem>>, vector<1x32xf32>
    tpu.vector_store %arg6[%c13, %c0_24], %51 {strides = array<i32>} : memref<16x32xf32, #tpu.memory_space<vmem>>, vector<1x32xf32>,
    %53 = vector.extract_strided_slice %2 {offsets = [12, 0], sizes = [2, 32], strides = [1, 1]} : vector<16x32xf32> to vector<2x32xf32>
    %cst_25 = arith.constant dense<0.000000e+00> : vector<2x32xf32>
    %54 = tpu.matmul %48, %3, %cst_25 {dimension_numbers = #tpu.dot_dimension_numbers<[1], [0], [0], [1], [0, 0, 1, 1], [], []>} : vector<2x32xf32>, vector<32x32xf32>, vector<2x32xf32> -> vector<2x32xf32>
    %55 = arith.addf %53, %54 : vector<2x32xf32>
    %56 = math.tanh %55 : vector<2x32xf32>
    %57 = vector.extract_strided_slice %56 {offsets = [0, 0], sizes = [1, 32], strides = [1, 1]} : vector<2x32xf32> to vector<1x32xf32>
    %c6 = arith.constant 6 : index
    %c0_26 = arith.constant 0 : index
    %58 = vector.load %arg6[%c6, %c0_26] : memref<16x32xf32, #tpu.memory_space<vmem>>, vector<1x32xf32>
    tpu.vector_store %arg6[%c6, %c0_26], %57 {strides = array<i32>} : memref<16x32xf32, #tpu.memory_space<vmem>>, vector<1x32xf32>,
    %59 = vector.extract_strided_slice %56 {offsets = [1, 0], sizes = [1, 32], strides = [1, 1]} : vector<2x32xf32> to vector<1x32xf32>
    %c14 = arith.constant 14 : index
    %c0_27 = arith.constant 0 : index
    %60 = vector.load %arg6[%c14, %c0_27] : memref<16x32xf32, #tpu.memory_space<vmem>>, vector<1x32xf32>
    tpu.vector_store %arg6[%c14, %c0_27], %59 {strides = array<i32>} : memref<16x32xf32, #tpu.memory_space<vmem>>, vector<1x32xf32>,
    %61 = vector.extract_strided_slice %2 {offsets = [14, 0], sizes = [2, 32], strides = [1, 1]} : vector<16x32xf32> to vector<2x32xf32>
    %cst_28 = arith.constant dense<0.000000e+00> : vector<2x32xf32>
    %62 = tpu.matmul %56, %3, %cst_28 {dimension_numbers = #tpu.dot_dimension_numbers<[1], [0], [0], [1], [0, 0, 1, 1], [], []>} : vector<2x32xf32>, vector<32x32xf32>, vector<2x32xf32> -> vector<2x32xf32>
    %63 = arith.addf %61, %62 : vector<2x32xf32>
    %64 = math.tanh %63 : vector<2x32xf32>
    %65 = vector.extract_strided_slice %64 {offsets = [0, 0], sizes = [1, 32], strides = [1, 1]} : vector<2x32xf32> to vector<1x32xf32>
    %c7 = arith.constant 7 : index
    %c0_29 = arith.constant 0 : index
    %66 = vector.load %arg6[%c7, %c0_29] : memref<16x32xf32, #tpu.memory_space<vmem>>, vector<1x32xf32>
    tpu.vector_store %arg6[%c7, %c0_29], %65 {strides = array<i32>} : memref<16x32xf32, #tpu.memory_space<vmem>>, vector<1x32xf32>,
    %67 = vector.extract_strided_slice %64 {offsets = [1, 0], sizes = [1, 32], strides = [1, 1]} : vector<2x32xf32> to vector<1x32xf32>
    %c15 = arith.constant 15 : index
    %c0_30 = arith.constant 0 : index
    %68 = vector.load %arg6[%c15, %c0_30] : memref<16x32xf32, #tpu.memory_space<vmem>>, vector<1x32xf32>
    tpu.vector_store %arg6[%c15, %c0_30], %67 {strides = array<i32>} : memref<16x32xf32, #tpu.memory_space<vmem>>, vector<1x32xf32>,
    %c0_31 = arith.constant 0 : index
    %c0_32 = arith.constant 0 : index
    %c0_33 = arith.constant 0 : index
    %69 = vector.load %arg5[%c0_31, %c0_32, %c0_33] : memref<1x2x32xf32, #tpu.memory_space<vmem>>, vector<1x2x32xf32>
    %70 = vector.shape_cast %69 : vector<1x2x32xf32> to vector<2x32xf32>
    %71 = vector.shape_cast %64 : vector<2x32xf32> to vector<1x2x32xf32>
    tpu.vector_store %arg5[%c0_31, %c0_32, %c0_33], %71 {strides = array<i32>} : memref<1x2x32xf32, #tpu.memory_space<vmem>>, vector<1x2x32xf32>,
    %c0_34 = arith.constant 0 : index
    %c0_35 = arith.constant 0 : index
    %72 = vector.load %arg6[%c0_34, %c0_35] : memref<16x32xf32, #tpu.memory_space<vmem>>, vector<16x32xf32>
    %c0_36 = arith.constant 0 : index
    %c0_37 = arith.constant 0 : index
    %73 = vector.load %arg3[%c0_36, %c0_37] : memref<32x8xf32, #tpu.memory_space<vmem>>, vector<32x8xf32>
    %cst_38 = arith.constant dense<0.000000e+00> : vector<16x8xf32>
    %74 = tpu.matmul %72, %73, %cst_38 {dimension_numbers = #tpu.dot_dimension_numbers<[1], [0], [0], [1], [0, 0, 1, 1], [], []>} : vector<16x32xf32>, vector<32x8xf32>, vector<16x8xf32> -> vector<16x8xf32>
    %c0_39 = arith.constant 0 : index
    %c0_40 = arith.constant 0 : index
    %75 = vector.load %arg4[%c0_39, %c0_40] : memref<16x8xf32, #tpu.memory_space<vmem>>, vector<16x8xf32>
    tpu.vector_store %arg4[%c0_39, %c0_40], %74 {strides = array<i32>} : memref<16x8xf32, #tpu.memory_space<vmem>>, vector<16x8xf32>,
    return
  }
}

</mosaic_0001>

<llo_original>
// kernel: rnn_forward.1
$region0: #{rnn_forward.1}
  #allocation0 [shape = 'u32[]', space=smem, size = 0x4, offset = 0x4, fixed_abs, tag = 'smem constant byte address 0x4 - core index']
  #allocation1 [shape = 'u32[72,128]{1,0:T(1,128)}', space=vmem, size = 0x9000, scoped, tag = 'internal scratch']
  #allocation2 [shape = 'f32[16,32]{1,0:T(8,128)}', space=vmem, size = 0x2000, scoped, tag = 'scratch operand']
  %s0 = inlined_call_operand.vmem [shape: f32[16,16], index: 0, kind: input, shape index: {}]
  %s1 = inlined_call_operand.vmem [shape: f32[16,32], index: 1, kind: input, shape index: {}]
  %s2 = inlined_call_operand.vmem [shape: f32[32,32], index: 2, kind: input, shape index: {}]
  %s3 = inlined_call_operand.vmem [shape: f32[32,8], index: 3, kind: input, shape index: {}]
  %s4 = inlined_call_operand.vmem [shape: f32[16,8], index: 4, kind: output, shape index: {0}]
  %s5 = inlined_call_operand.hbm [shape: f32[1,2,32], index: 5, kind: output, shape index: {1}]
  %6 = xla_tuple %s4, %s5
  %s7 = sld [smem:[#allocation0]]
  $region34: #{rnn_forward.1} parent=0
    _
  %s9 = ssub.s32 1, %s7
  %s10 = scalar_select 0, %s9, %s7
  $region1: #{rnn_forward.1} parent=0
    #allocation3 [shape = 'u8[1024]{0}', space=vmem, size = 0x400, scoped, tag = 'output window, operand 1, single buffered']
    #allocation4 [shape = 's32[1]{0}', space=sflag, size = 0x4, scoped, tag = 'scoped memory for rnn_forward.1']
    %11 = vsyncpa [#allocation4], 0
    // Predicated region
    $region2: #{rnn_forward.1} parent=1 // pred_check
      _
    $region3: #{rnn_forward.1} parent=1 // pred_check_branch
      %13 = sbr.rel (0) target = $region5
    $region4: #{rnn_forward.1} parent=1 // pred_region
      _
    $region5: #{rnn_forward.1} parent=1 // pred_fallthru
      _
    // Predicated region
    $region6: #{rnn_forward.1} parent=1 // pred_check
      _
    $region7: #{rnn_forward.1} parent=1 // pred_check_branch
      %15 = sbr.rel (0) target = $region9
    $region8: #{rnn_forward.1} parent=1 // pred_region
      _
    $region9: #{rnn_forward.1} parent=1 // pred_fallthru
      _
    // Predicated region
    $region10: #{rnn_forward.1} parent=1 // pred_check
      _
    $region11: #{rnn_forward.1} parent=1 // pred_check_branch
      %17 = sbr.rel (0) target = $region13
    $region12: #{rnn_forward.1} parent=1 // pred_region
      _
    $region13: #{rnn_forward.1} parent=1 // pred_fallthru
      _
    // Predicated region
    $region14: #{rnn_forward.1} parent=1 // pred_check
      _
    $region15: #{rnn_forward.1} parent=1 // pred_check_branch
      %19 = sbr.rel (0) target = $region17
    $region16: #{rnn_forward.1} parent=1 // pred_region
      _
    $region17: #{rnn_forward.1} parent=1 // pred_fallthru
      _
    %v20 = vld [vmem:[%s0] sm:$0xff]
    %v21 = vld [vmem:[%s0 + $0x8] sm:$0xff]
    %v22 = vld [vmem:[%s1] sm:$0xff]
    %v23 = vld [vmem:[%s1 + $0x8] sm:$0xff]
    %vm24 = vcmask 130048
    %v26 = vsel %vm24, %v20, 0
    %v29 = vsel %vm24, %v21, 0
    %31 = vmatpush.msra.mxu0 0.0
    %32 = vmatpush.msra.mxu0 0.0
    %33 = vmatpush.msra.mxu0 0.0
    %34 = vmatpush.msra.mxu0 0.0
    %35 = vmatpush.msra.mxu0 0.0
    %36 = vmatpush.msra.mxu0 0.0
    %37 = vmatpush.msra.mxu0 0.0
    %38 = vmatpush.msra.mxu0 0.0
    %39 = vmatpush.msra.mxu0 0.0
    %40 = vmatpush.msra.mxu0 0.0
    %41 = vmatpush.msra.mxu0 0.0
    %42 = vmatpush.msra.mxu0 0.0
    %43 = vmatpush.msra.mxu0 0.0
    %44 = vmatpush.msra.mxu0 0.0
    %45 = vmatpush.msra.mxu0 %v23
    %46 = vmatpush.msra.mxu0 %v22
    %47 = vmatmul.f32.gmra.mxu0 %v26
    %v48 = vpop.f32.mrf.mxu0
    %v49 = vadd.f32 0.0, %v48
    %50 = vmatmul.f32.gmra.mxu0 %v29
    %v51 = vpop.f32.mrf.mxu0
    %v52 = vadd.f32 0.0, %v51
    %53 = vdwg.mxu0
    %v54 = vld [vmem:[%s2] sm:$0xff]
    %v55 = vld [vmem:[%s2 + $0x8] sm:$0xff]
    %v56 = vld [vmem:[%s2 + $0x10] sm:$0xff]
    %v57 = vld [vmem:[%s2 + $0x18] sm:$0xff]
    %vm58 = vcmask 261120
    %v60 = vsel %vm58, 0.0, 0
    %62 = vmatpush.msra.mxu0 0.0
    %63 = vmatpush.msra.mxu0 0.0
    %64 = vmatpush.msra.mxu0 0.0
    %65 = vmatpush.msra.mxu0 0.0
    %66 = vmatpush.msra.mxu0 0.0
    %67 = vmatpush.msra.mxu0 0.0
    %68 = vmatpush.msra.mxu0 0.0
    %69 = vmatpush.msra.mxu0 0.0
    %70 = vmatpush.msra.mxu0 0.0
    %71 = vmatpush.msra.mxu0 0.0
    %72 = vmatpush.msra.mxu0 0.0
    %73 = vmatpush.msra.mxu0 0.0
    %74 = vmatpush.msra.mxu0 %v57
    %75 = vmatpush.msra.mxu0 %v56
    %76 = vmatpush.msra.mxu0 %v55
    %77 = vmatpush.msra.mxu0 %v54
    %78 = vmatmul.f32.gmra.mxu0 %v60
    %v79 = vpop.f32.mrf.mxu0
    %v80 = vadd.f32 0.0, %v79
    %81 = vdwg.mxu0
    %v82 = vadd.f32 %v49, %v80
    %v83 = vtanh.pop %v82
    %vm84 = vcmask 253952
    %85 = vst.msk [vmem:[#allocation2] sm:$0x1] %vm84, %v83
    %vm86 = vcmask 254977
    %87 = vst.msk [vmem:[#allocation2 + $0x7] sm:$0x2] %vm86, %v83
    %v89 = vsel %vm58, %v83, 0
    %91 = vmatpush.msra.mxu0 0.0
    %92 = vmatpush.msra.mxu0 0.0
    %93 = vmatpush.msra.mxu0 0.0
    %94 = vmatpush.msra.mxu0 0.0
    %95 = vmatpush.msra.mxu0 0.0
    %96 = vmatpush.msra.mxu0 0.0
    %97 = vmatpush.msra.mxu0 0.0
    %98 = vmatpush.msra.mxu0 0.0
    %99 = vmatpush.msra.mxu0 0.0
    %100 = vmatpush.msra.mxu0 0.0
    %101 = vmatpush.msra.mxu0 0.0
    %102 = vmatpush.msra.mxu0 0.0
    %103 = vmatpush.msra.mxu0 %v57
    %104 = vmatpush.msra.mxu0 %v56
    %105 = vmatpush.msra.mxu0 %v55
    %106 = vmatpush.msra.mxu0 %v54
    %107 = vmatmul.f32.gmra.mxu0 %v89
    %v108 = vpop.f32.mrf.mxu0
    %v109 = vadd.f32 0.0, %v108
    %110 = vdwg.mxu0
    %v112 = vrot.slane %v109, 6
    %v114 = vadd.f32 %v49, %v112
    %v115 = vtanh.pop %v114
    %vm116 = vcmask 256002
    %117 = vst.msk [vmem:[#allocation2 - $0x1] sm:$0x4] %vm116, %v115
    %vm118 = vcmask 257027
    %119 = vst.msk [vmem:[#allocation2 + $0x6] sm:$0x8] %vm118, %v115
    %v121 = vrot.slane %v115, 2
    %v122 = vsel %vm58, %v121, 0
    %124 = vmatpush.msra.mxu0 0.0
    %125 = vmatpush.msra.mxu0 0.0
    %126 = vmatpush.msra.mxu0 0.0
    %127 = vmatpush.msra.mxu0 0.0
    %128 = vmatpush.msra.mxu0 0.0
    %129 = vmatpush.msra.mxu0 0.0
    %130 = vmatpush.msra.mxu0 0.0
    %131 = vmatpush.msra.mxu0 0.0
    %132 = vmatpush.msra.mxu0 0.0
    %133 = vmatpush.msra.mxu0 0.0
    %134 = vmatpush.msra.mxu0 0.0
    %135 = vmatpush.msra.mxu0 0.0
    %136 = vmatpush.msra.mxu0 %v57
    %137 = vmatpush.msra.mxu0 %v56
    %138 = vmatpush.msra.mxu0 %v55
    %139 = vmatpush.msra.mxu0 %v54
    %140 = vmatmul.f32.gmra.mxu0 %v122
    %v141 = vpop.f32.mrf.mxu0
    %v142 = vadd.f32 0.0, %v141
    %143 = vdwg.mxu0
    %v145 = vrot.slane %v142, 4
    %v147 = vadd.f32 %v49, %v145
    %v148 = vtanh.pop %v147
    %vm149 = vcmask 258052
    %150 = vst.msk [vmem:[#allocation2 - $0x2] sm:$0x10] %vm149, %v148
    %vm151 = vcmask 259077
    %152 = vst.msk [vmem:[#allocation2 + $0x5] sm:$0x20] %vm151, %v148
    %v154 = vrot.slane %v148, 4
    %v155 = vsel %vm58, %v154, 0
    %157 = vmatpush.msra.mxu0 0.0
    %158 = vmatpush.msra.mxu0 0.0
    %159 = vmatpush.msra.mxu0 0.0
    %160 = vmatpush.msra.mxu0 0.0
    %161 = vmatpush.msra.mxu0 0.0
    %162 = vmatpush.msra.mxu0 0.0
    %163 = vmatpush.msra.mxu0 0.0
    %164 = vmatpush.msra.mxu0 0.0
    %165 = vmatpush.msra.mxu0 0.0
    %166 = vmatpush.msra.mxu0 0.0
    %167 = vmatpush.msra.mxu0 0.0
    %168 = vmatpush.msra.mxu0 0.0
    %169 = vmatpush.msra.mxu0 %v57
    %170 = vmatpush.msra.mxu0 %v56
    %171 = vmatpush.msra.mxu0 %v55
    %172 = vmatpush.msra.mxu0 %v54
    %173 = vmatmul.f32.gmra.mxu0 %v155
    %v174 = vpop.f32.mrf.mxu0
    %v175 = vadd.f32 0.0, %v174
    %176 = vdwg.mxu0
    %v178 = vrot.slane %v175, 2
    %v180 = vadd.f32 %v49, %v178
    %v181 = vtanh.pop %v180
    %vm182 = vcmask 260102
    %183 = vst.msk [vmem:[#allocation2 - $0x3] sm:$0x40] %vm182, %v181
    %vm184 = vcmask 261127
    %185 = vst.msk [vmem:[#allocation2 + $0x4] sm:$0x80] %vm184, %v181
    %v187 = vrot.slane %v181, 6
    %v188 = vsel %vm58, %v187, 0
    %190 = vmatpush.msra.mxu0 0.0
    %191 = vmatpush.msra.mxu0 0.0
    %192 = vmatpush.msra.mxu0 0.0
    %193 = vmatpush.msra.mxu0 0.0
    %194 = vmatpush.msra.mxu0 0.0
    %195 = vmatpush.msra.mxu0 0.0
    %196 = vmatpush.msra.mxu0 0.0
    %197 = vmatpush.msra.mxu0 0.0
    %198 = vmatpush.msra.mxu0 0.0
    %199 = vmatpush.msra.mxu0 0.0
    %200 = vmatpush.msra.mxu0 0.0
    %201 = vmatpush.msra.mxu0 0.0
    %202 = vmatpush.msra.mxu0 %v57
    %203 = vmatpush.msra.mxu0 %v56
    %204 = vmatpush.msra.mxu0 %v55
    %205 = vmatpush.msra.mxu0 %v54
    %206 = vmatmul.f32.gmra.mxu0 %v188
    %v207 = vpop.f32.mrf.mxu0
    %v208 = vadd.f32 0.0, %v207
    %209 = vdwg.mxu0
    %v210 = vadd.f32 %v52, %v208
    %v211 = vtanh.pop %v210
    %212 = vst.msk [vmem:[#allocation2 + $0x4] sm:$0x1] %vm84, %v211
    %213 = vst.msk [vmem:[#allocation2 + $0xb] sm:$0x2] %vm86, %v211
    %v215 = vsel %vm58, %v211, 0
    %217 = vmatpush.msra.mxu0 0.0
    %218 = vmatpush.msra.mxu0 0.0
    %219 = vmatpush.msra.mxu0 0.0
    %220 = vmatpush.msra.mxu0 0.0
    %221 = vmatpush.msra.mxu0 0.0
    %222 = vmatpush.msra.mxu0 0.0
    %223 = vmatpush.msra.mxu0 0.0
    %224 = vmatpush.msra.mxu0 0.0
    %225 = vmatpush.msra.mxu0 0.0
    %226 = vmatpush.msra.mxu0 0.0
    %227 = vmatpush.msra.mxu0 0.0
    %228 = vmatpush.msra.mxu0 0.0
    %229 = vmatpush.msra.mxu0 %v57
    %230 = vmatpush.msra.mxu0 %v56
    %231 = vmatpush.msra.mxu0 %v55
    %232 = vmatpush.msra.mxu0 %v54
    %233 = vmatmul.f32.gmra.mxu0 %v215
    %v234 = vpop.f32.mrf.mxu0
    %v235 = vadd.f32 0.0, %v234
    %236 = vdwg.mxu0
    %v238 = vrot.slane %v235, 6
    %v240 = vadd.f32 %v52, %v238
    %v241 = vtanh.pop %v240
    %242 = vst.msk [vmem:[#allocation2 + $0x3] sm:$0x4] %vm116, %v241
    %243 = vst.msk [vmem:[#allocation2 + $0xa] sm:$0x8] %vm118, %v241
    %v245 = vrot.slane %v241, 2
    %v246 = vsel %vm58, %v245, 0
    %248 = vmatpush.msra.mxu0 0.0
    %249 = vmatpush.msra.mxu0 0.0
    %250 = vmatpush.msra.mxu0 0.0
    %251 = vmatpush.msra.mxu0 0.0
    %252 = vmatpush.msra.mxu0 0.0
    %253 = vmatpush.msra.mxu0 0.0
    %254 = vmatpush.msra.mxu0 0.0
    %255 = vmatpush.msra.mxu0 0.0
    %256 = vmatpush.msra.mxu0 0.0
    %257 = vmatpush.msra.mxu0 0.0
    %258 = vmatpush.msra.mxu0 0.0
    %259 = vmatpush.msra.mxu0 0.0
    %260 = vmatpush.msra.mxu0 %v57
    %261 = vmatpush.msra.mxu0 %v56
    %262 = vmatpush.msra.mxu0 %v55
    %263 = vmatpush.msra.mxu0 %v54
    %264 = vmatmul.f32.gmra.mxu0 %v246
    %v265 = vpop.f32.mrf.mxu0
    %v266 = vadd.f32 0.0, %v265
    %267 = vdwg.mxu0
    %v269 = vrot.slane %v266, 4
    %v271 = vadd.f32 %v52, %v269
    %v272 = vtanh.pop %v271
    %273 = vst.msk [vmem:[#allocation2 + $0x2] sm:$0x10] %vm149, %v272
    %274 = vst.msk [vmem:[#allocation2 + $0x9] sm:$0x20] %vm151, %v272
    %v276 = vrot.slane %v272, 4
    %v277 = vsel %vm58, %v276, 0
    %279 = vmatpush.msra.mxu0 0.0
    %280 = vmatpush.msra.mxu0 0.0
    %281 = vmatpush.msra.mxu0 0.0
    %282 = vmatpush.msra.mxu0 0.0
    %283 = vmatpush.msra.mxu0 0.0
    %284 = vmatpush.msra.mxu0 0.0
    %285 = vmatpush.msra.mxu0 0.0
    %286 = vmatpush.msra.mxu0 0.0
    %287 = vmatpush.msra.mxu0 0.0
    %288 = vmatpush.msra.mxu0 0.0
    %289 = vmatpush.msra.mxu0 0.0
    %290 = vmatpush.msra.mxu0 0.0
    %291 = vmatpush.msra.mxu0 %v57
    %292 = vmatpush.msra.mxu0 %v56
    %293 = vmatpush.msra.mxu0 %v55
    %294 = vmatpush.msra.mxu0 %v54
    %295 = vmatmul.f32.gmra.mxu0 %v277
    %v296 = vpop.f32.mrf.mxu0
    %v297 = vadd.f32 0.0, %v296
    %298 = vdwg.mxu0
    %v300 = vrot.slane %v297, 2
    %v302 = vadd.f32 %v52, %v300
    %v303 = vtanh.pop %v302
    %304 = vst.msk [vmem:[#allocation2 + $0x1] sm:$0x40] %vm182, %v303
    %305 = vst.msk [vmem:[#allocation2 + $0x8] sm:$0x80] %vm184, %v303
    %vm306 = vcmask 261126
    %307 = vst.msk [vmem:[#allocation3 - $0x6] sm:$0xc0] %vm306, %v303
    %v308 = vld [vmem:[#allocation2] sm:$0xff]
    %v309 = vld [vmem:[#allocation2 + $0x8] sm:$0xff]
    %v310 = vld [vmem:[%s3] sm:$0xff]
    %v311 = vld [vmem:[%s3 + $0x8] sm:$0xff]
    %v312 = vld [vmem:[%s3 + $0x10] sm:$0xff]
    %v313 = vld [vmem:[%s3 + $0x18] sm:$0xff]
    %v315 = vsel %vm58, %v308, 0
    %v318 = vsel %vm58, %v309, 0
    %320 = vmatpush.msra.mxu0 0.0
    %321 = vmatpush.msra.mxu0 0.0
    %322 = vmatpush.msra.mxu0 0.0
    %323 = vmatpush.msra.mxu0 0.0
    %324 = vmatpush.msra.mxu0 0.0
    %325 = vmatpush.msra.mxu0 0.0
    %326 = vmatpush.msra.mxu0 0.0
    %327 = vmatpush.msra.mxu0 0.0
    %328 = vmatpush.msra.mxu0 0.0
    %329 = vmatpush.msra.mxu0 0.0
    %330 = vmatpush.msra.mxu0 0.0
    %331 = vmatpush.msra.mxu0 0.0
    %332 = vmatpush.msra.mxu0 %v313
    %333 = vmatpush.msra.mxu0 %v312
    %334 = vmatpush.msra.mxu0 %v311
    %335 = vmatpush.msra.mxu0 %v310
    %336 = vmatmul.f32.gmra.mxu0 %v315
    %v337 = vpop.f32.mrf.mxu0
    %v338 = vadd.f32 0.0, %v337
    %339 = vmatmul.f32.gmra.mxu0 %v318
    %v340 = vpop.f32.mrf.mxu0
    %v341 = vadd.f32 0.0, %v340
    %342 = vdwg.mxu0
    %vm343 = vcmask 64512
    %344 = vst.msk [vmem:[%s4] sm:$0xff] %vm343, %v338
    %345 = vst.msk [vmem:[%s4 + $0x8] sm:$0xff] %vm343, %v341
    // Predicated region
    $region18: #{rnn_forward.1} parent=1 // pred_check
      _
    $region19: #{rnn_forward.1} parent=1 // pred_check_branch
      %347 = sbr.rel (0) target = $region21
    $region20: #{rnn_forward.1} parent=1 // pred_region
      _
    $region21: #{rnn_forward.1} parent=1 // pred_fallthru
      _
    // Predicated region
    $region22: #{rnn_forward.1} parent=1 // pred_check
      _
    $region23: #{rnn_forward.1} parent=1 // pred_check_branch
      %349 = sbr.rel (0) target = $region25
    $region24: #{rnn_forward.1} parent=1 // pred_region
      %351 = vsyncadd [#allocation4], 0
      %s353 = sshll.u32 [#allocation3], 4
      %s354 = int_to_ptr.vmem [resolvable:$true] %s353
      %s355 = sshll.u32 %s5, 4
      %s356 = int_to_ptr.hbm [resolvable:$true] %s355
      %358 = dma.vmem_to_hbm [thread:$0]  %s354, 32, %s356, [#allocation4]
    $region25: #{rnn_forward.1} parent=1 // pred_fallthru
      _
    // Predicated region
    $region26: #{rnn_forward.1} parent=1 // pred_check
      _
    $region27: #{rnn_forward.1} parent=1 // pred_check_branch
      %360 = sbr.rel (0) target = $region29
    $region28: #{rnn_forward.1} parent=1 // pred_region
      _
    $region29: #{rnn_forward.1} parent=1 // pred_fallthru
      _
    // Predicated region
    $region30: #{rnn_forward.1} parent=1 // pred_check
      _
    $region31: #{rnn_forward.1} parent=1 // pred_check_branch
      %362 = sbr.rel (0) target = $region33
    $region32: #{rnn_forward.1} parent=1 // pred_region
      %364 = dma.done [#allocation4], 32
    $region33: #{rnn_forward.1} parent=1 // pred_fallthru
      _
    %365 = vsyncpa [#allocation4], 1

</llo_original>
